<compile_context>
chip_gen: v6e
topology: v6e:2x2x1
jax: 0.10.0
libtpu: 0.0.40
codegen_flags: <defaults>
</compile_context>

<pallas_src>
import functools

import jax
import jax.numpy as jnp
from jax.experimental import pallas as pl
from jax.experimental.pallas import tpu as pltpu


def _outconv_kernel(x_ref, w_ref, b_ref, o_ref):
    # x_ref: (1, C_in, TILE_R, 128) VMEM     w_ref: (C_out, C_in) SMEM
    # b_ref: (C_out,) SMEM                   o_ref: (1, C_out, TILE_R, 128) VMEM
    c_out, c_in = w_ref.shape
    # Tiny contraction: unrolled scalar-x-plane MACs on the VPU.  For this
    # module C_in/C_out are small; the MXU would pad K/N to 128/256 and waste
    # the array on a DMA-bound kernel.
    # TODO(synk): if a large-C_in variant appears, restructure to an MXU path.
    for o in range(c_out):
        acc = x_ref[0, 0].astype(jnp.float32) * w_ref[o, 0]
        for k in range(1, c_in):
            acc = acc + x_ref[0, k].astype(jnp.float32) * w_ref[o, k]
        acc = acc + b_ref[o]
        # sigmoid -> logistic on the EUP (free slot relative to the VALU MACs)
        o_ref[0, o] = jax.nn.sigmoid(acc).astype(o_ref.dtype)


def _pick_tile_rows(rows, target_rows, min_blocks):
    """Pick a sublane-row tile (multiple of 8, or the full extent) that divides
    `rows` exactly.  Returns (tile_r, n_blocks)."""
    if rows <= target_rows and min_blocks <= 1:
        return rows, 1
    cap = min(target_rows, rows)
    if min_blocks > 1:
        cap = min(cap, max(8, rows // min_blocks))
    t = (cap // 8) * 8
    while t >= 8:
        if rows % t == 0:
            return t, rows // t
        t -= 8
    # No multiple-of-8 divisor <= cap: fall back to a single full-extent block
    # (caller handles the pathological "way too big" case by padding).
    return rows, 1


@functools.partial(jax.jit, static_argnames=("tile_s",))
def outconv_forward(x_nchw, weight, bias, *, tile_s=131072):
    """1x1 conv + sigmoid, matching PyTorch outconv.forward.

    x_nchw : (N, C_in, H, W) float32
    weight : (C_out, C_in, 1, 1) float32   (PyTorch Conv2d weight layout)
    bias   : (C_out,) float32
    returns: (N, C_out, H, W) float32
    """
    N, C_in, H, W = x_nchw.shape
    C_out = weight.shape[0]
    S = H * W

    w_mat = weight.reshape(C_out, C_in)
    b_vec = bias.reshape(C_out)

    # Target rows per spatial tile: tile_s elements / 128 lanes, multiple of 8.
    target_rows = max(8, (tile_s // 128 // 8) * 8)          # 1024 by default

    rows = pl.cdiv(S, 128)                                  # plane rows
    min_blocks = 2 if N == 1 else 1                         # keep both v7x TCs busy
    tile_r, n_s = _pick_tile_rows(rows, target_rows, min_blocks)
    if n_s == 1 and tile_r > 2 * target_rows:
        # Pathological row count (no small divisor): pad rows so clean,
        # VMEM-sized tiles divide exactly.
        tile_r = target_rows
        n_s = pl.cdiv(rows, tile_r)
    rows_pad = tile_r * n_s
    s_total = rows_pad * 128

    x3 = x_nchw.reshape(N, C_in, S)                         # free reshape (NCHW contiguous)
    if s_total != S:
        # Only hit when S is not a multiple of 128 (or the rare pathological
        # case above); padded lanes compute sigmoid(bias) and are sliced away.
        x3 = jnp.pad(x3, ((0, 0), (0, 0), (0, s_total - S)))
    x4 = x3.reshape(N, C_in, rows_pad, 128)                 # full-sublane plane layout

    # Per-step VMEM at tile_r=1024: in 4*1024*128*4 = 2 MiB, out 3*1024*128*4
    # = 1.5 MiB, x2 double-buffering ~= 7 MiB.  32 MiB limit gives headroom on
    # v5e (16 MiB default scoped) and matches v6e/v7x defaults.
    out = pl.pallas_call(
        _outconv_kernel,
        out_shape=jax.ShapeDtypeStruct((N, C_out, rows_pad, 128), x_nchw.dtype),
        grid_spec=pltpu.PrefetchScalarGridSpec(
            num_scalar_prefetch=0,
            grid=(N, n_s),
            in_specs=[
                pl.BlockSpec((1, C_in, tile_r, 128), lambda n, s: (n, 0, s, 0)),
                pl.BlockSpec(memory_space=pltpu.MemorySpace.SMEM),   # weight
                pl.BlockSpec(memory_space=pltpu.MemorySpace.SMEM),   # bias
            ],
            out_specs=pl.BlockSpec((1, C_out, tile_r, 128),
                                   lambda n, s: (n, 0, s, 0)),
        ),
        compiler_params=pltpu.CompilerParams(
            # Both axes independent -> megacore sharding on v7x (2 TCs).
            dimension_semantics=("parallel", "parallel"),
            vmem_limit_bytes=32 * 1024 * 1024),
    )(x4, w_mat, b_vec)

    out = out.reshape(N, C_out, s_total)
    if s_total != S:
        out = out[:, :, :S]
    return out.reshape(N, C_out, H, W)


def _reference(x_nchw, weight, bias):
    w_mat = weight.reshape(weight.shape[0], weight.shape[1])   # (C_out, C_in)
    y = jnp.einsum("nchw,oc->nohw", x_nchw, w_mat) + bias[None, :, None, None]
    return jax.nn.sigmoid(y)


if __name__ == "__main__":
    key = jax.random.PRNGKey(0)
    k_x, k_w, k_b = jax.random.split(key, 3)

    N, C_in, H, W = 2, 4, 16, 16
    C_out = 3

    x = jax.random.normal(k_x, (N, C_in, H, W), dtype=jnp.float32)
    # Deterministic synthetic parameters (Conv2d(in_ch, out_ch, 1) shapes).
    weight = jax.random.normal(k_w, (C_out, C_in, 1, 1), dtype=jnp.float32) * 0.1
    bias = jax.random.normal(k_b, (C_out,), dtype=jnp.float32) * 0.1

    out = outconv_forward(x, weight, bias)
    jax.block_until_ready(out)

    ref = _reference(x, weight, bias)
    assert out.shape == (N, C_out, H, W)
    assert jnp.allclose(out, ref, atol=1e-5, rtol=1e-5), "mismatch vs reference"

    print("KERNEL_OK")
</pallas_src>

<mosaic_0001>
module attributes {stable_mosaic.version = 11 : i64} {
  func.func @_outconv_kernel(%arg0: i32, %arg1: i32, %arg2: memref<1x4x2x128xf32, #tpu.memory_space<vmem>>, %arg3: memref<3x4xf32, #tpu.memory_space<smem>>, %arg4: memref<3xf32, #tpu.memory_space<smem>>, %arg5: memref<1x3x2x128xf32, #tpu.memory_space<vmem>>) attributes {dimension_semantics = [#tpu.dimension_semantics<parallel>, #tpu.dimension_semantics<parallel>], iteration_bounds = array<i64: 2, 1>, scalar_prefetch = 0 : i64, scratch_operands = 0 : i64, tpu.core_type = #tpu.core_type<tc>, window_params = [{transform_indices = @transform_0, window_bounds = array<i64: 1, 4, 2, 128>}, {transform_indices = @transform_1, window_bounds = array<i64: 3, 4>}, {transform_indices = @transform_2, window_bounds = array<i64: 3>}, {transform_indices = @transform_3, window_bounds = array<i64: 1, 3, 2, 128>}]} {
    %c0 = arith.constant 0 : index
    %c0_0 = arith.constant 0 : index
    %c0_1 = arith.constant 0 : index
    %c0_2 = arith.constant 0 : index
    %0 = vector.load %arg2[%c0, %c0_0, %c0_1, %c0_2] : memref<1x4x2x128xf32, #tpu.memory_space<vmem>>, vector<1x1x2x128xf32>
    %1 = vector.shape_cast %0 : vector<1x1x2x128xf32> to vector<2x128xf32>
    %c0_3 = arith.constant 0 : index
    %c0_4 = arith.constant 0 : index
    %2 = memref.load %arg3[%c0_3, %c0_4] : memref<3x4xf32, #tpu.memory_space<smem>>
    %3 = vector.broadcast %2 : f32 to vector<2x128xf32>
    %4 = arith.mulf %1, %3 : vector<2x128xf32>
    %c0_5 = arith.constant 0 : index
    %c1 = arith.constant 1 : index
    %c0_6 = arith.constant 0 : index
    %c0_7 = arith.constant 0 : index
    %5 = vector.load %arg2[%c0_5, %c1, %c0_6, %c0_7] : memref<1x4x2x128xf32, #tpu.memory_space<vmem>>, vector<1x1x2x128xf32>
    %6 = vector.shape_cast %5 : vector<1x1x2x128xf32> to vector<2x128xf32>
    %c0_8 = arith.constant 0 : index
    %c1_9 = arith.constant 1 : index
    %7 = memref.load %arg3[%c0_8, %c1_9] : memref<3x4xf32, #tpu.memory_space<smem>>
    %8 = vector.broadcast %7 : f32 to vector<2x128xf32>
    %9 = arith.mulf %6, %8 : vector<2x128xf32>
    %10 = arith.addf %4, %9 : vector<2x128xf32>
    %c0_10 = arith.constant 0 : index
    %c2 = arith.constant 2 : index
    %c0_11 = arith.constant 0 : index
    %c0_12 = arith.constant 0 : index
    %11 = vector.load %arg2[%c0_10, %c2, %c0_11, %c0_12] : memref<1x4x2x128xf32, #tpu.memory_space<vmem>>, vector<1x1x2x128xf32>
    %12 = vector.shape_cast %11 : vector<1x1x2x128xf32> to vector<2x128xf32>
    %c0_13 = arith.constant 0 : index
    %c2_14 = arith.constant 2 : index
    %13 = memref.load %arg3[%c0_13, %c2_14] : memref<3x4xf32, #tpu.memory_space<smem>>
    %14 = vector.broadcast %13 : f32 to vector<2x128xf32>
    %15 = arith.mulf %12, %14 : vector<2x128xf32>
    %16 = arith.addf %10, %15 : vector<2x128xf32>
    %c0_15 = arith.constant 0 : index
    %c3 = arith.constant 3 : index
    %c0_16 = arith.constant 0 : index
    %c0_17 = arith.constant 0 : index
    %17 = vector.load %arg2[%c0_15, %c3, %c0_16, %c0_17] : memref<1x4x2x128xf32, #tpu.memory_space<vmem>>, vector<1x1x2x128xf32>
    %18 = vector.shape_cast %17 : vector<1x1x2x128xf32> to vector<2x128xf32>
    %c0_18 = arith.constant 0 : index
    %c3_19 = arith.constant 3 : index
    %19 = memref.load %arg3[%c0_18, %c3_19] : memref<3x4xf32, #tpu.memory_space<smem>>
    %20 = vector.broadcast %19 : f32 to vector<2x128xf32>
    %21 = arith.mulf %18, %20 : vector<2x128xf32>
    %22 = arith.addf %16, %21 : vector<2x128xf32>
    %c0_20 = arith.constant 0 : index
    %23 = memref.load %arg4[%c0_20] : memref<3xf32, #tpu.memory_space<smem>>
    %24 = vector.broadcast %23 : f32 to vector<2x128xf32>
    %25 = arith.addf %22, %24 : vector<2x128xf32>
    %26 = arith.negf %25 : vector<2x128xf32>
    %27 = math.exp %26 : vector<2x128xf32>
    %cst = arith.constant 1.000000e+00 : f32
    %28 = vector.broadcast %cst : f32 to vector<2x128xf32>
    %29 = arith.addf %28, %27 : vector<2x128xf32>
    %30 = arith.divf %28, %29 : vector<2x128xf32>
    %c0_21 = arith.constant 0 : index
    %c0_22 = arith.constant 0 : index
    %c0_23 = arith.constant 0 : index
    %c0_24 = arith.constant 0 : index
    %31 = vector.load %arg5[%c0_21, %c0_22, %c0_23, %c0_24] : memref<1x3x2x128xf32, #tpu.memory_space<vmem>>, vector<1x1x2x128xf32>
    %32 = vector.shape_cast %31 : vector<1x1x2x128xf32> to vector<2x128xf32>
    %33 = vector.shape_cast %30 : vector<2x128xf32> to vector<1x1x2x128xf32>
    tpu.vector_store %arg5[%c0_21, %c0_22, %c0_23, %c0_24], %33 {strides = array<i32>} : memref<1x3x2x128xf32, #tpu.memory_space<vmem>>, vector<1x1x2x128xf32>,
    %c0_25 = arith.constant 0 : index
    %c0_26 = arith.constant 0 : index
    %c0_27 = arith.constant 0 : index
    %c0_28 = arith.constant 0 : index
    %34 = vector.load %arg2[%c0_25, %c0_26, %c0_27, %c0_28] : memref<1x4x2x128xf32, #tpu.memory_space<vmem>>, vector<1x1x2x128xf32>
    %35 = vector.shape_cast %34 : vector<1x1x2x128xf32> to vector<2x128xf32>
    %c1_29 = arith.constant 1 : index
    %c0_30 = arith.constant 0 : index
    %36 = memref.load %arg3[%c1_29, %c0_30] : memref<3x4xf32, #tpu.memory_space<smem>>
    %37 = vector.broadcast %36 : f32 to vector<2x128xf32>
    %38 = arith.mulf %35, %37 : vector<2x128xf32>
    %c0_31 = arith.constant 0 : index
    %c1_32 = arith.constant 1 : index
    %c0_33 = arith.constant 0 : index
    %c0_34 = arith.constant 0 : index
    %39 = vector.load %arg2[%c0_31, %c1_32, %c0_33, %c0_34] : memref<1x4x2x128xf32, #tpu.memory_space<vmem>>, vector<1x1x2x128xf32>
    %40 = vector.shape_cast %39 : vector<1x1x2x128xf32> to vector<2x128xf32>
    %c1_35 = arith.constant 1 : index
    %c1_36 = arith.constant 1 : index
    %41 = memref.load %arg3[%c1_35, %c1_36] : memref<3x4xf32, #tpu.memory_space<smem>>
    %42 = vector.broadcast %41 : f32 to vector<2x128xf32>
    %43 = arith.mulf %40, %42 : vector<2x128xf32>
    %44 = arith.addf %38, %43 : vector<2x128xf32>
    %c0_37 = arith.constant 0 : index
    %c2_38 = arith.constant 2 : index
    %c0_39 = arith.constant 0 : index
    %c0_40 = arith.constant 0 : index
    %45 = vector.load %arg2[%c0_37, %c2_38, %c0_39, %c0_40] : memref<1x4x2x128xf32, #tpu.memory_space<vmem>>, vector<1x1x2x128xf32>
    %46 = vector.shape_cast %45 : vector<1x1x2x128xf32> to vector<2x128xf32>
    %c1_41 = arith.constant 1 : index
    %c2_42 = arith.constant 2 : index
    %47 = memref.load %arg3[%c1_41, %c2_42] : memref<3x4xf32, #tpu.memory_space<smem>>
    %48 = vector.broadcast %47 : f32 to vector<2x128xf32>
    %49 = arith.mulf %46, %48 : vector<2x128xf32>
    %50 = arith.addf %44, %49 : vector<2x128xf32>
    %c0_43 = arith.constant 0 : index
    %c3_44 = arith.constant 3 : index
    %c0_45 = arith.constant 0 : index
    %c0_46 = arith.constant 0 : index
    %51 = vector.load %arg2[%c0_43, %c3_44, %c0_45, %c0_46] : memref<1x4x2x128xf32, #tpu.memory_space<vmem>>, vector<1x1x2x128xf32>
    %52 = vector.shape_cast %51 : vector<1x1x2x128xf32> to vector<2x128xf32>
    %c1_47 = arith.constant 1 : index
    %c3_48 = arith.constant 3 : index
    %53 = memref.load %arg3[%c1_47, %c3_48] : memref<3x4xf32, #tpu.memory_space<smem>>
    %54 = vector.broadcast %53 : f32 to vector<2x128xf32>
    %55 = arith.mulf %52, %54 : vector<2x128xf32>
    %56 = arith.addf %50, %55 : vector<2x128xf32>
    %c1_49 = arith.constant 1 : index
    %57 = memref.load %arg4[%c1_49] : memref<3xf32, #tpu.memory_space<smem>>
    %58 = vector.broadcast %57 : f32 to vector<2x128xf32>
    %59 = arith.addf %56, %58 : vector<2x128xf32>
    %60 = arith.negf %59 : vector<2x128xf32>
    %61 = math.exp %60 : vector<2x128xf32>
    %cst_50 = arith.constant 1.000000e+00 : f32
    %62 = vector.broadcast %cst_50 : f32 to vector<2x128xf32>
    %63 = arith.addf %62, %61 : vector<2x128xf32>
    %64 = arith.divf %62, %63 : vector<2x128xf32>
    %c0_51 = arith.constant 0 : index
    %c1_52 = arith.constant 1 : index
    %c0_53 = arith.constant 0 : index
    %c0_54 = arith.constant 0 : index
    %65 = vector.load %arg5[%c0_51, %c1_52, %c0_53, %c0_54] : memref<1x3x2x128xf32, #tpu.memory_space<vmem>>, vector<1x1x2x128xf32>
    %66 = vector.shape_cast %65 : vector<1x1x2x128xf32> to vector<2x128xf32>
    %67 = vector.shape_cast %64 : vector<2x128xf32> to vector<1x1x2x128xf32>
    tpu.vector_store %arg5[%c0_51, %c1_52, %c0_53, %c0_54], %67 {strides = array<i32>} : memref<1x3x2x128xf32, #tpu.memory_space<vmem>>, vector<1x1x2x128xf32>,
    %c0_55 = arith.constant 0 : index
    %c0_56 = arith.constant 0 : index
    %c0_57 = arith.constant 0 : index
    %c0_58 = arith.constant 0 : index
    %68 = vector.load %arg2[%c0_55, %c0_56, %c0_57, %c0_58] : memref<1x4x2x128xf32, #tpu.memory_space<vmem>>, vector<1x1x2x128xf32>
    %69 = vector.shape_cast %68 : vector<1x1x2x128xf32> to vector<2x128xf32>
    %c2_59 = arith.constant 2 : index
    %c0_60 = arith.constant 0 : index
    %70 = memref.load %arg3[%c2_59, %c0_60] : memref<3x4xf32, #tpu.memory_space<smem>>
    %71 = vector.broadcast %70 : f32 to vector<2x128xf32>
    %72 = arith.mulf %69, %71 : vector<2x128xf32>
    %c0_61 = arith.constant 0 : index
    %c1_62 = arith.constant 1 : index
    %c0_63 = arith.constant 0 : index
    %c0_64 = arith.constant 0 : index
    %73 = vector.load %arg2[%c0_61, %c1_62, %c0_63, %c0_64] : memref<1x4x2x128xf32, #tpu.memory_space<vmem>>, vector<1x1x2x128xf32>
    %74 = vector.shape_cast %73 : vector<1x1x2x128xf32> to vector<2x128xf32>
    %c2_65 = arith.constant 2 : index
    %c1_66 = arith.constant 1 : index
    %75 = memref.load %arg3[%c2_65, %c1_66] : memref<3x4xf32, #tpu.memory_space<smem>>
    %76 = vector.broadcast %75 : f32 to vector<2x128xf32>
    %77 = arith.mulf %74, %76 : vector<2x128xf32>
    %78 = arith.addf %72, %77 : vector<2x128xf32>
    %c0_67 = arith.constant 0 : index
    %c2_68 = arith.constant 2 : index
    %c0_69 = arith.constant 0 : index
    %c0_70 = arith.constant 0 : index
    %79 = vector.load %arg2[%c0_67, %c2_68, %c0_69, %c0_70] : memref<1x4x2x128xf32, #tpu.memory_space<vmem>>, vector<1x1x2x128xf32>
    %80 = vector.shape_cast %79 : vector<1x1x2x128xf32> to vector<2x128xf32>
    %c2_71 = arith.constant 2 : index
    %c2_72 = arith.constant 2 : index
    %81 = memref.load %arg3[%c2_71, %c2_72] : memref<3x4xf32, #tpu.memory_space<smem>>
    %82 = vector.broadcast %81 : f32 to vector<2x128xf32>
    %83 = arith.mulf %80, %82 : vector<2x128xf32>
    %84 = arith.addf %78, %83 : vector<2x128xf32>
    %c0_73 = arith.constant 0 : index
    %c3_74 = arith.constant 3 : index
    %c0_75 = arith.constant 0 : index
    %c0_76 = arith.constant 0 : index
    %85 = vector.load %arg2[%c0_73, %c3_74, %c0_75, %c0_76] : memref<1x4x2x128xf32, #tpu.memory_space<vmem>>, vector<1x1x2x128xf32>
    %86 = vector.shape_cast %85 : vector<1x1x2x128xf32> to vector<2x128xf32>
    %c2_77 = arith.constant 2 : index
    %c3_78 = arith.constant 3 : index
    %87 = memref.load %arg3[%c2_77, %c3_78] : memref<3x4xf32, #tpu.memory_space<smem>>
    %88 = vector.broadcast %87 : f32 to vector<2x128xf32>
    %89 = arith.mulf %86, %88 : vector<2x128xf32>
    %90 = arith.addf %84, %89 : vector<2x128xf32>
    %c2_79 = arith.constant 2 : index
    %91 = memref.load %arg4[%c2_79] : memref<3xf32, #tpu.memory_space<smem>>
    %92 = vector.broadcast %91 : f32 to vector<2x128xf32>
    %93 = arith.addf %90, %92 : vector<2x128xf32>
    %94 = arith.negf %93 : vector<2x128xf32>
    %95 = math.exp %94 : vector<2x128xf32>
    %cst_80 = arith.constant 1.000000e+00 : f32
    %96 = vector.broadcast %cst_80 : f32 to vector<2x128xf32>
    %97 = arith.addf %96, %95 : vector<2x128xf32>
    %98 = arith.divf %96, %97 : vector<2x128xf32>
    %c0_81 = arith.constant 0 : index
    %c2_82 = arith.constant 2 : index
    %c0_83 = arith.constant 0 : index
    %c0_84 = arith.constant 0 : index
    %99 = vector.load %arg5[%c0_81, %c2_82, %c0_83, %c0_84] : memref<1x3x2x128xf32, #tpu.memory_space<vmem>>, vector<1x1x2x128xf32>
    %100 = vector.shape_cast %99 : vector<1x1x2x128xf32> to vector<2x128xf32>
    %101 = vector.shape_cast %98 : vector<2x128xf32> to vector<1x1x2x128xf32>
    tpu.vector_store %arg5[%c0_81, %c2_82, %c0_83, %c0_84], %101 {strides = array<i32>} : memref<1x3x2x128xf32, #tpu.memory_space<vmem>>, vector<1x1x2x128xf32>,
    return
  }
  func.func @transform_0(%arg0: i32, %arg1: i32) -> (i32, i32, i32, i32) {
    %c0_i32 = arith.constant 0 : i32
    %c0_i32_0 = arith.constant 0 : i32
    %c0_i32_1 = arith.constant 0 : i32
    return %arg0, %c0_i32, %arg1, %c0_i32_0 : i32, i32, i32, i32
  }
  func.func @transform_1(%arg0: i32, %arg1: i32) -> (i32, i32) {
    %c0_i32 = arith.constant 0 : i32
    %c0_i32_0 = arith.constant 0 : i32
    %c0_i32_1 = arith.constant 0 : i32
    return %c0_i32, %c0_i32_0 : i32, i32
  }
  func.func @transform_2(%arg0: i32, %arg1: i32) -> i32 {
    %c0_i32 = arith.constant 0 : i32
    %c0_i32_0 = arith.constant 0 : i32
    return %c0_i32 : i32
  }
  func.func @transform_3(%arg0: i32, %arg1: i32) -> (i32, i32, i32, i32) {
    %c0_i32 = arith.constant 0 : i32
    %c0_i32_0 = arith.constant 0 : i32
    %c0_i32_1 = arith.constant 0 : i32
    return %arg0, %c0_i32, %arg1, %c0_i32_0 : i32, i32, i32, i32
  }
}

</mosaic_0001>

<llo_original>
// kernel: outconv_forward.1
$region0: #{outconv_forward.1}
  #allocation0 [shape = 'u32[]', space=smem, size = 0x4, offset = 0x4, fixed_abs, tag = 'smem constant byte address 0x4 - core index']
  #allocation1 [shape = 'u32[144,128]{1,0:T(1,128)}', space=vmem, size = 0x12000, scoped, tag = 'internal scratch']
  %s0 = inlined_call_operand.vmem [shape: f32[2,4,2,128], index: 0, kind: input, shape index: {}]
  %s1 = inlined_call_operand.vmem [shape: f32[3,4], index: 1, kind: input, shape index: {}]
  %s2 = inlined_call_operand.vmem [shape: f32[3], index: 2, kind: input, shape index: {}]
  %s3 = inlined_call_operand.vmem [shape: f32[2,3,2,128], index: 3, kind: output, shape index: {}]
  %s4 = sld [smem:[#allocation0]]
  $region53: #{outconv_forward.1} parent=0
    _
  %s6 = ssub.s32 1, %s4
  %s7 = scalar_select 0, %s6, %s4
  $region1: #{outconv_forward.1} parent=0
    #allocation2 [shape = 'u8[2048]{0}', space=smem, size = 0x800, scoped, tag = 'input window, operand 1, single buffered']
    #allocation3 [shape = 's32[2]{0}', space=sflag, size = 0x8, scoped, tag = 'scoped memory for outconv_forward.1']
    #allocation4 [shape = 'u8[512]{0}', space=smem, size = 0x200, scoped, tag = 'input window, operand 2, single buffered']
    #allocation5 [shape = 's32[1]{0}', space=sflag, size = 0x4, scoped, tag = 'scoped memory for outconv_forward.1']
    %8 = vsyncpa [#allocation3], 0
    %9 = vsyncpa [#allocation5], 0
    loop: start=0, step=1, limit=4
    $region2: #{outconv_forward.1} parent=1 // loop_pre_header
      _
    $region3: #{outconv_forward.1} parent=1 // loop_header
      %s11 = sphi 0, %s15
      %p12 = scmp.ge.s32.totalorder %s11, 4
      %s18 = sphi 0, %s30
      %s19 = sphi 0, %s26
      %s20 = sphi 0, %s18
      %s21 = sphi 0, %s19
      %s22 = sphi 0, %s20
      %s23 = sphi 0, %s21
      %s35 = sphi 0, %s37
      %s38 = sphi 0, %s35
      %s39 = sphi 0, %s38
      %s55 = sphi 0, %s39
      %s59 = sphi 0, %s59
      %s61 = sphi 0, %s59
      %s62 = sphi 0, %s61
      %s76 = sphi 0, %s62
      %s80 = sphi 0, %s80
      %s82 = sphi 0, %s80
      %s83 = sphi 0, %s82
      %s97 = sphi 0, %s83
      %s105 = sphi 0, %s107
      %s108 = sphi 0, %s105
      %s109 = sphi 0, %s108
      %s125 = sphi 0, %s109
    $region4: #{outconv_forward.1} parent=1 // loop_header_branch
      %14 = sbr.rel (%p12) target = $region8
    $region5: #{outconv_forward.1} parent=1 // loop_body
      %s16 = ssub.s32 %s11, 1
      %s17 = ssub.s32 %s11, 2
      %s24 = sadd.s32 1, %s19
      %p25 = scmp.ge.s32.totalorder %s24, 1
      %s26 = scalar_select %p25, 0, %s24
      %s27 = sadd.s32 1, %s18
      %s28 = scalar_select %p25, %s27, %s18
      %p29 = scmp.ge.s32.totalorder %s28, 2
      %s30 = scalar_select %p29, 0, %s28
      %s31 = ssub.s32 %s18, %s30
      %s32 = ssub.s32 %s19, %s26
      %s33 = sor.u32 %s31, %s32
      %p34 = scmp.eq.s32.totalorder %s33, 0
      %s36 = sadd.s32 %s35, 1
      %s37 = scalar_select %p34, %s35, %s36
      %p40 = pneg %p34
      %p41 = scmp.eq.s32.totalorder %s11, 1
      %p42 = por %p40, %p41
      %p43 = scmp.ne.s32.totalorder %s35, %s38
      %p44 = scmp.eq.s32.totalorder %s11, 0
      %p45 = por %p43, %p44
      %p46 = scmp.ne.s32.totalorder %s35, %s38
      %p47 = scmp.eq.s32.totalorder %s16, 1
      %p48 = por %p46, %p47
      %p49 = scmp.ne.s32.totalorder %s38, %s39
      %p50 = scmp.eq.s32.totalorder %s16, 0
      %p51 = por %p49, %p50
      %p52 = scmp.ne.s32.totalorder %s38, %s39
      %p53 = scmp.eq.s32.totalorder %s17, 1
      %p54 = por %p52, %p53
      %p56 = scmp.ne.s32.totalorder %s39, %s55
      %p57 = scmp.eq.s32.totalorder %s17, 0
      %p58 = por %p56, %p57
      %s60 = sadd.s32 %s59, 1
      %p63 = scmp.eq.s32.totalorder %s11, 1
      %p64 = scmp.ne.s32.totalorder %s59, %s61
      %p65 = scmp.eq.s32.totalorder %s11, 0
      %p66 = por %p64, %p65
      %p67 = scmp.ne.s32.totalorder %s59, %s61
      %p68 = scmp.eq.s32.totalorder %s16, 1
      %p69 = por %p67, %p68
      %p70 = scmp.ne.s32.totalorder %s61, %s62
      %p71 = scmp.eq.s32.totalorder %s16, 0
      %p72 = por %p70, %p71
      %p73 = scmp.ne.s32.totalorder %s61, %s62
      %p74 = scmp.eq.s32.totalorder %s17, 1
      %p75 = por %p73, %p74
      %p77 = scmp.ne.s32.totalorder %s62, %s76
      %p78 = scmp.eq.s32.totalorder %s17, 0
      %p79 = por %p77, %p78
      %s81 = sadd.s32 %s80, 1
      %p84 = scmp.eq.s32.totalorder %s11, 1
      %p85 = scmp.ne.s32.totalorder %s80, %s82
      %p86 = scmp.eq.s32.totalorder %s11, 0
      %p87 = por %p85, %p86
      %p88 = scmp.ne.s32.totalorder %s80, %s82
      %p89 = scmp.eq.s32.totalorder %s16, 1
      %p90 = por %p88, %p89
      %p91 = scmp.ne.s32.totalorder %s82, %s83
      %p92 = scmp.eq.s32.totalorder %s16, 0
      %p93 = por %p91, %p92
      %p94 = scmp.ne.s32.totalorder %s82, %s83
      %p95 = scmp.eq.s32.totalorder %s17, 1
      %p96 = por %p94, %p95
      %p98 = scmp.ne.s32.totalorder %s83, %s97
      %p99 = scmp.eq.s32.totalorder %s17, 0
      %p100 = por %p98, %p99
      %s101 = ssub.s32 %s18, %s30
      %s102 = ssub.s32 %s19, %s26
      %s103 = sor.u32 %s101, %s102
      %p104 = scmp.eq.s32.totalorder %s103, 0
      %s106 = sadd.s32 %s105, 1
      %s107 = scalar_select %p104, %s105, %s106
      %p110 = pneg %p104
      %p111 = scmp.eq.s32.totalorder %s11, 1
      %p112 = por %p110, %p111
      %p113 = scmp.ne.s32.totalorder %s105, %s108
      %p114 = scmp.eq.s32.totalorder %s11, 0
      %p115 = por %p113, %p114
      %p116 = scmp.ne.s32.totalorder %s105, %s108
      %p117 = scmp.eq.s32.totalorder %s16, 1
      %p118 = por %p116, %p117
      %p119 = scmp.ne.s32.totalorder %s108, %s109
      %p120 = scmp.eq.s32.totalorder %s16, 0
      %p121 = por %p119, %p120
      %p122 = scmp.ne.s32.totalorder %s108, %s109
      %p123 = scmp.eq.s32.totalorder %s17, 1
      %p124 = por %p122, %p123
      %p126 = scmp.ne.s32.totalorder %s109, %s125
      %p127 = scmp.eq.s32.totalorder %s17, 0
      %p128 = por %p126, %p127
      %p129 = scmp.le.s32.totalorder 1, %s11
      %p130 = scmp.lt.s32.totalorder %s11, 3
      %p131 = pnand %p129, %p130
      %p132 = pneg %p131
      // Predicated region
      $region9: #{outconv_forward.1} parent=5 // pred_check
        _
      $region10: #{outconv_forward.1} parent=5 // pred_check_branch
        %134 = sbr.rel (%p131) target = $region12
      $region11: #{outconv_forward.1} parent=5 // pred_region
        %s135 = ssub.s32 %s11, 1
        // Predicated region
        $region13: #{outconv_forward.1} parent=11 // pred_check
          %p136 = pneg %p72
        $region14: #{outconv_forward.1} parent=11 // pred_check_branch
          %138 = sbr.rel (%p136) target = $region16
        $region15: #{outconv_forward.1} parent=11 // pred_region
          %s140 = ssub.s32 64, 64
          %141 = vsyncadd [#allocation3], %s140
          %s143 = sshll.u32 %s1, 4
          %s144 = int_to_ptr.vmem [resolvable:$true] %s143
          %146 = dma.vmem_to_smem %s144, 64, [#allocation2], [#allocation3]
        $region16: #{outconv_forward.1} parent=11 // pred_fallthru
          _
        // Predicated region
        $region17: #{outconv_forward.1} parent=11 // pred_check
          %p147 = pneg %p93
        $region18: #{outconv_forward.1} parent=11 // pred_check_branch
          %149 = sbr.rel (%p147) target = $region20
        $region19: #{outconv_forward.1} parent=11 // pred_region
          %s151 = ssub.s32 16, 16
          %152 = vsyncadd [#allocation5], %s151
          %s154 = sshll.u32 %s2, 4
          %s155 = int_to_ptr.vmem [resolvable:$true] %s154
          %157 = dma.vmem_to_smem %s155, 16, [#allocation4], [#allocation5]
        $region20: #{outconv_forward.1} parent=11 // pred_fallthru
          _
      $region12: #{outconv_forward.1} parent=5 // pred_fallthru
        _
      %p158 = scmp.lt.s32.totalorder %s11, 2
      // Predicated region
      $region21: #{outconv_forward.1} parent=5 // pred_check
        %p159 = pneg %p158
      $region22: #{outconv_forward.1} parent=5 // pred_check_branch
        %161 = sbr.rel (%p159) target = $region24
      $region23: #{outconv_forward.1} parent=5 // pred_region
        // Predicated region
        $region25: #{outconv_forward.1} parent=23 // pred_check
          %p162 = pneg %p45
        $region26: #{outconv_forward.1} parent=23 // pred_check_branch
          %164 = sbr.rel (%p162) target = $region28
        $region27: #{outconv_forward.1} parent=23 // pred_region
          %p165 = scmp.lt.s32.totalorder %s18, 1
          %s166 = scalar_select %p165, %s18, 1
          %p167 = scmp.lt.s32.totalorder %s19, 0
          %s168 = scalar_select %p167, %s19, 0
          %s169 = smul.addr %s166, 4
          %s170 = sadd.s32 %s168, %s169
          %s171 = smul.addr %s170, 2
          %s172 = scalar_lea.vmem %s0, %s171
        $region28: #{outconv_forward.1} parent=23 // pred_fallthru
          _
      $region24: #{outconv_forward.1} parent=5 // pred_fallthru
        _
      %p173 = scmp.le.s32.totalorder 1, %s11
      %p174 = scmp.lt.s32.totalorder %s11, 3
      %p175 = pnand %p173, %p174
      %p176 = pneg %p175
      // Predicated region
      $region29: #{outconv_forward.1} parent=5 // pred_check
        _
      $region30: #{outconv_forward.1} parent=5 // pred_check_branch
        %178 = sbr.rel (%p175) target = $region32
      $region31: #{outconv_forward.1} parent=5 // pred_region
        %s179 = ssub.s32 %s11, 1
        // Predicated region
        $region33: #{outconv_forward.1} parent=31 // pred_check
          %p180 = pneg %p72
        $region34: #{outconv_forward.1} parent=31 // pred_check_branch
          %182 = sbr.rel (%p180) target = $region36
        $region35: #{outconv_forward.1} parent=31 // pred_region
          %183 = dma.done [#allocation3], 64
        $region36: #{outconv_forward.1} parent=31 // pred_fallthru
          _
        // Predicated region
        $region37: #{outconv_forward.1} parent=31 // pred_check
          %p184 = pneg %p93
        $region38: #{outconv_forward.1} parent=31 // pred_check_branch
          %186 = sbr.rel (%p184) target = $region40
        $region39: #{outconv_forward.1} parent=31 // pred_region
          %187 = dma.done [#allocation5], 16
        $region40: #{outconv_forward.1} parent=31 // pred_fallthru
          _
        %188 = sfence
        %p189 = scmp.lt.s32.totalorder %s20, 1
        %s190 = scalar_select %p189, %s20, 1
        %p191 = scmp.lt.s32.totalorder %s21, 0
        %s192 = scalar_select %p191, %s21, 0
        %s193 = smul.addr %s190, 4
        %s194 = sadd.s32 %s192, %s193
        %s195 = smul.addr %s194, 2
        %s196 = scalar_lea.vmem %s0, %s195
        %p197 = pneg %p51
        %p198 = pneg %p48
        %p199 = pneg %p72
        %p200 = pneg %p69
        %p201 = pneg %p93
        %p202 = pneg %p90
        %p203 = pneg %p121
        %p204 = pneg %p118
        %p205 = scmp.lt.s32.totalorder %s20, 1
        %s206 = scalar_select %p205, %s20, 1
        %p207 = scmp.lt.s32.totalorder %s21, 0
        %s208 = scalar_select %p207, %s21, 0
        %s209 = smul.addr %s206, 3
        %s210 = sadd.s32 %s208, %s209
        %s211 = smul.addr %s210, 2
        %s212 = scalar_lea.vmem %s3, %s211
        %p213 = scmp.lt.s32.totalorder %s20, 1
        %s214 = scalar_select %p213, %s20, 1
        %p215 = scmp.lt.s32.totalorder %s21, 0
        %s216 = scalar_select %p215, %s21, 0
        %s217 = smul.addr %s214, 4
        %s218 = sadd.s32 %s216, %s217
        %s219 = smul.addr %s218, 2
        %s220 = scalar_lea.vmem %s0, %s219
        %p221 = scmp.lt.s32.totalorder %s20, 1
        %s222 = scalar_select %p221, %s20, 1
        %p223 = scmp.lt.s32.totalorder %s21, 0
        %s224 = scalar_select %p223, %s21, 0
        %s225 = smul.addr %s222, 3
        %s226 = sadd.s32 %s224, %s225
        %s227 = smul.addr %s226, 2
        %s228 = scalar_lea.vmem %s3, %s227
        %v229 = vld [vmem:[%s220] sm:$0x3]
        %s230 = sld [smem:[#allocation2]]
        %v231 = vstv %s230
        %v232 = vmul.f32 %v229, %v231
        %s233 = scalar_lea.vmem %s220, 2
        %v234 = vld [vmem:[%s233] sm:$0x3]
        %s235 = sld [smem:[#allocation2 + $0x1]]
        %v236 = vstv %s235
        %v237 = vmul.f32 %v234, %v236
        %v238 = vadd.f32 %v232, %v237
        %s239 = scalar_lea.vmem %s220, 4
        %v240 = vld [vmem:[%s239] sm:$0x3]
        %s241 = sld [smem:[#allocation2 + $0x2]]
        %v242 = vstv %s241
        %v243 = vmul.f32 %v240, %v242
        %v244 = vadd.f32 %v238, %v243
        %s245 = scalar_lea.vmem %s220, 6
        %v246 = vld [vmem:[%s245] sm:$0x3]
        %s247 = sld [smem:[#allocation2 + $0x3]]
        %v248 = vstv %s247
        %v249 = vmul.f32 %v246, %v248
        %v250 = vadd.f32 %v244, %v249
        %s251 = sld [smem:[#allocation4]]
        %v252 = vstv %s251
        %v253 = vadd.f32 %v250, %v252
        %v254 = vxor.u32 %v253, 2147483648
        %v255 = vmul.f32 %v254, 1.442695
        %v256 = vpow.pop %v255
        %v257 = vadd.f32 %v256, 1.0
        %v258 = vrcp.pop %v257
        %v259 = vmul.f32 1.0, %v258
        %260 = vst [vmem:[%s228] sm:$0x3] %v259
        %v261 = vld [vmem:[%s220] sm:$0x3]
        %s262 = sld [smem:[#allocation2 + $0x80]]
        %v263 = vstv %s262
        %v264 = vmul.f32 %v261, %v263
        %v265 = vld [vmem:[%s233] sm:$0x3]
        %s266 = sld [smem:[#allocation2 + $0x81]]
        %v267 = vstv %s266
        %v268 = vmul.f32 %v265, %v267
        %v269 = vadd.f32 %v264, %v268
        %v270 = vld [vmem:[%s239] sm:$0x3]
        %s271 = sld [smem:[#allocation2 + $0x82]]
        %v272 = vstv %s271
        %v273 = vmul.f32 %v270, %v272
        %v274 = vadd.f32 %v269, %v273
        %v275 = vld [vmem:[%s245] sm:$0x3]
        %s276 = sld [smem:[#allocation2 + $0x83]]
        %v277 = vstv %s276
        %v278 = vmul.f32 %v275, %v277
        %v279 = vadd.f32 %v274, %v278
        %s280 = sld [smem:[#allocation4 + $0x1]]
        %v281 = vstv %s280
        %v282 = vadd.f32 %v279, %v281
        %v283 = vxor.u32 %v282, 2147483648
        %v284 = vmul.f32 %v283, 1.442695
        %v285 = vpow.pop %v284
        %v286 = vadd.f32 %v285, 1.0
        %v287 = vrcp.pop %v286
        %v288 = vmul.f32 1.0, %v287
        %s289 = scalar_lea.vmem %s228, 2
        %290 = vst [vmem:[%s289] sm:$0x3] %v288
        %v291 = vld [vmem:[%s220] sm:$0x3]
        %s292 = sld [smem:[#allocation2 + $0x100]]
        %v293 = vstv %s292
        %v294 = vmul.f32 %v291, %v293
        %v295 = vld [vmem:[%s233] sm:$0x3]
        %s296 = sld [smem:[#allocation2 + $0x101]]
        %v297 = vstv %s296
        %v298 = vmul.f32 %v295, %v297
        %v299 = vadd.f32 %v294, %v298
        %v300 = vld [vmem:[%s239] sm:$0x3]
        %s301 = sld [smem:[#allocation2 + $0x102]]
        %v302 = vstv %s301
        %v303 = vmul.f32 %v300, %v302
        %v304 = vadd.f32 %v299, %v303
        %v305 = vld [vmem:[%s245] sm:$0x3]
        %s306 = sld [smem:[#allocation2 + $0x103]]
        %v307 = vstv %s306
        %v308 = vmul.f32 %v305, %v307
        %v309 = vadd.f32 %v304, %v308
        %s310 = sld [smem:[#allocation4 + $0x2]]
        %v311 = vstv %s310
        %v312 = vadd.f32 %v309, %v311
        %v313 = vxor.u32 %v312, 2147483648
        %v314 = vmul.f32 %v313, 1.442695
        %v315 = vpow.pop %v314
        %v316 = vadd.f32 %v315, 1.0
        %v317 = vrcp.pop %v316
        %v318 = vmul.f32 1.0, %v317
        %s319 = scalar_lea.vmem %s228, 4
        %320 = vst [vmem:[%s319] sm:$0x3] %v318
        %p321 = scmp.lt.s32.totalorder %s20, 1
        %s322 = scalar_select %p321, %s20, 1
        %p323 = scmp.lt.s32.totalorder %s21, 0
        %s324 = scalar_select %p323, %s21, 0
        %s325 = smul.addr %s322, 3
        %s326 = sadd.s32 %s324, %s325
        %s327 = smul.addr %s326, 2
        %s328 = scalar_lea.vmem %s3, %s327
        // Predicated region
        $region41: #{outconv_forward.1} parent=31 // pred_check
          %p329 = pneg %p118
        $region42: #{outconv_forward.1} parent=31 // pred_check_branch
          %331 = sbr.rel (%p329) target = $region44
        $region43: #{outconv_forward.1} parent=31 // pred_region
          _
        $region44: #{outconv_forward.1} parent=31 // pred_fallthru
          _
      $region32: #{outconv_forward.1} parent=5 // pred_fallthru
        _
      %p332 = scmp.le.s32.totalorder 2, %s11
      // Predicated region
      $region45: #{outconv_forward.1} parent=5 // pred_check
        %p333 = pneg %p332
      $region46: #{outconv_forward.1} parent=5 // pred_check_branch
        %335 = sbr.rel (%p333) target = $region48
      $region47: #{outconv_forward.1} parent=5 // pred_region
        %s336 = ssub.s32 %s11, 2
        // Predicated region
        $region49: #{outconv_forward.1} parent=47 // pred_check
          %p337 = pneg %p124
        $region50: #{outconv_forward.1} parent=47 // pred_check_branch
          %339 = sbr.rel (%p337) target = $region52
        $region51: #{outconv_forward.1} parent=47 // pred_region
          %p340 = scmp.lt.s32.totalorder %s22, 1
          %s341 = scalar_select %p340, %s22, 1
          %p342 = scmp.lt.s32.totalorder %s23, 0
          %s343 = scalar_select %p342, %s23, 0
          %s344 = smul.addr %s341, 3
          %s345 = sadd.s32 %s343, %s344
          %s346 = smul.addr %s345, 2
          %s347 = scalar_lea.vmem %s3, %s346
        $region52: #{outconv_forward.1} parent=47 // pred_fallthru
          _
      $region48: #{outconv_forward.1} parent=5 // pred_fallthru
        _
    $region6: #{outconv_forward.1} parent=1 // loop_footer
      %s15 = sadd.s32 1, %s11
    $region7: #{outconv_forward.1} parent=1 // loop_footer_branch
      %10 = sbr.rel target = $region3
    $region8: #{outconv_forward.1} parent=1 // loop_exit
      _
    %348 = vsyncpa [#allocation3], 1
    %s349 = scalar_lea.sflag [#allocation3], 1
    %350 = vsyncpa %s349, 1
    %351 = vsyncpa [#allocation5], 1

</llo_original>
